<compile_context>
chip_gen: v7x
topology: tpu7x:2x2x1
jax: 0.10.0
libtpu: 0.0.40
codegen_flags: <defaults>
</compile_context>

<pallas_src>
import functools

import jax
import jax.numpy as jnp
from jax.experimental import pallas as pl
from jax.experimental.pallas import tpu as pltpu

LANE = 128     # vreg lane width
SUBLANE = 8    # f32 sublane width


def _round_up(n, m):
    return ((n + m - 1) // m) * m


def _pad2d(a, rows, cols):
    return jnp.pad(a, ((0, rows - a.shape[0]), (0, cols - a.shape[1])))


def actor_mlp_kernel(x_ref, w1_ref, b1_ref, w2_ref, b2_ref, w3_ref, b3_ref, o_ref):
    # One batch-row tile per grid step; everything is lane-dense after the
    # wrapper-side padding, so this is a straight fused MXU/VPU pipeline.
    x = x_ref[...]

    h1 = jnp.dot(x, w1_ref[...], preferred_element_type=jnp.float32) + b1_ref[...]
    h1 = jnp.maximum(h1, 0.0)

    h2 = jnp.dot(h1, w2_ref[...], preferred_element_type=jnp.float32) + b2_ref[...]
    h2 = jnp.maximum(h2, 0.0)

    y = jnp.dot(h2, w3_ref[...], preferred_element_type=jnp.float32) + b3_ref[...]
    o_ref[...] = jnp.tanh(y).astype(o_ref.dtype)


def actor_forward(x, params, *, max_block_rows=1024):
    """x: (batch, input_dim) float32; params: dict of w1,b1,w2,b2,w3,b3.

    Weights are (in_features, out_features), so y = x @ W + b (transpose of
    PyTorch's nn.Linear storage, numerically identical forward pass).
    """
    w1, b1 = params["w1"], params["b1"]
    w2, b2 = params["w2"], params["b2"]
    w3, b3 = params["w3"], params["b3"]

    batch, in_dim = x.shape
    h1_dim = w1.shape[1]
    h2_dim = w2.shape[1]
    out_dim = w3.shape[1]

    # Padded feature widths: contraction dims -> sublane multiple,
    # output-feature dims -> full lane width (lane-dense stores & vregs).
    k0 = _round_up(in_dim, SUBLANE)
    k1 = _round_up(h1_dim, LANE)
    k2 = _round_up(h2_dim, LANE)
    n3 = _round_up(out_dim, LANE)

    # Batch row tile: big enough to amortize the ~0.35us/step overhead, small
    # enough (<1 MiB activations double-buffered + ~130 KiB weights) to fit
    # comfortably under the 32 MiB default scoped-VMEM limit on all chips.
    block_rows = min(max_block_rows, _round_up(batch, SUBLANE))
    b_pad = _round_up(batch, block_rows)

    x_p = jnp.pad(x.astype(jnp.float32), ((0, b_pad - batch), (0, k0 - in_dim)))
    w1_p = _pad2d(w1, k0, k1)
    w2_p = _pad2d(w2, k1, k2)
    w3_p = _pad2d(w3, k2, n3)
    b1_p = _pad2d(b1.reshape(1, -1), 1, k1)
    b2_p = _pad2d(b2.reshape(1, -1), 1, k2)
    b3_p = _pad2d(b3.reshape(1, -1), 1, n3)

    grid = (b_pad // block_rows,)

    def const_spec(shape):
        # Full-array block, constant index -> DMA'd once, resident in VMEM.
        return pl.BlockSpec(shape, lambda i: (0,) * len(shape))

    out_padded = pl.pallas_call(
        actor_mlp_kernel,
        out_shape=jax.ShapeDtypeStruct((b_pad, n3), jnp.float32),
        grid=grid,
        in_specs=[
            pl.BlockSpec((block_rows, k0), lambda i: (i, 0)),   # x tile (pipelined)
            const_spec(w1_p.shape), const_spec(b1_p.shape),
            const_spec(w2_p.shape), const_spec(b2_p.shape),
            const_spec(w3_p.shape), const_spec(b3_p.shape),
        ],
        out_specs=pl.BlockSpec((block_rows, n3), lambda i: (i, 0)),
        compiler_params=pltpu.CompilerParams(
            dimension_semantics=("parallel",),   # shard batch grid across v7x's 2 TCs
        ),
    )(x_p, w1_p, b1_p, w2_p, b2_p, w3_p, b3_p)

    # Strip batch/feature padding in the wrapper (kernel output stays lane-dense).
    return out_padded[:batch, :out_dim]


def init_actor_params(key, input_dim, hidden_dims, output_dim):
    """Deterministic init mimicking PyTorch nn.Linear default (uniform +/- 1/sqrt(fan_in))."""
    dims = [input_dim] + list(hidden_dims) + [output_dim]
    params = {}
    keys = jax.random.split(key, 2 * (len(dims) - 1))
    for i in range(len(dims) - 1):
        fan_in, fan_out = dims[i], dims[i + 1]
        bound = 1.0 / (fan_in ** 0.5)
        params[f"w{i+1}"] = jax.random.uniform(
            keys[2 * i], (fan_in, fan_out), jnp.float32, -bound, bound
        )
        params[f"b{i+1}"] = jax.random.uniform(
            keys[2 * i + 1], (fan_out,), jnp.float32, -bound, bound
        )
    return params


def actor_reference(x, params):
    """Pure-JAX reference for correctness check."""
    h = jnp.maximum(x @ params["w1"] + params["b1"], 0.0)
    h = jnp.maximum(h @ params["w2"] + params["b2"], 0.0)
    return jnp.tanh(h @ params["w3"] + params["b3"])


if __name__ == "__main__":
    # Pendulum-v1-like dimensions: obs dim 3, hidden (32, 32), action dim 1.
    input_dim, hidden_dims, output_dim = 3, (32, 32), 1

    key = jax.random.PRNGKey(0)
    pkey, xkey1, xkey2 = jax.random.split(key, 3)
    params = init_actor_params(pkey, input_dim, hidden_dims, output_dim)

    fwd = jax.jit(functools.partial(actor_forward, max_block_rows=1024))

    # Primary small check (batch=8).
    x = jax.random.normal(xkey1, (8, input_dim), jnp.float32)
    out = jax.block_until_ready(fwd(x, params))
    ref = actor_reference(x, params)
    assert out.shape == (8, output_dim)
    assert jnp.allclose(out, ref, atol=1e-5, rtol=1e-5), "mismatch vs reference (batch=8)"

    # Secondary check with a ragged batch to exercise the row-padding path.
    x2 = jax.random.normal(xkey2, (37, input_dim), jnp.float32)
    out2 = jax.block_until_ready(fwd(x2, params))
    ref2 = actor_reference(x2, params)
    assert out2.shape == (37, output_dim)
    assert jnp.allclose(out2, ref2, atol=1e-5, rtol=1e-5), "mismatch vs reference (batch=37)"

    print("KERNEL_OK")
</pallas_src>

<mosaic_0001>
module attributes {stable_mosaic.version = 11 : i64} {
  func.func @actor_mlp_kernel(%arg0: i32, %arg1: memref<8x8xf32, #tpu.memory_space<vmem>>, %arg2: memref<8x128xf32, #tpu.memory_space<vmem>>, %arg3: memref<1x128xf32, #tpu.memory_space<vmem>>, %arg4: memref<128x128xf32, #tpu.memory_space<vmem>>, %arg5: memref<1x128xf32, #tpu.memory_space<vmem>>, %arg6: memref<128x128xf32, #tpu.memory_space<vmem>>, %arg7: memref<1x128xf32, #tpu.memory_space<vmem>>, %arg8: memref<8x128xf32, #tpu.memory_space<vmem>>) attributes {dimension_semantics = [#tpu.dimension_semantics<parallel>], iteration_bounds = array<i64: 1>, scalar_prefetch = 0 : i64, scratch_operands = 0 : i64, tpu.core_type = #tpu.core_type<tc>, window_params = [{transform_indices = @transform_0, window_bounds = array<i64: 8, 8>}, {pipeline_mode = #tpu.pipeline_mode<synchronous>, transform_indices = @transform_1, window_bounds = array<i64: 8, 128>}, {pipeline_mode = #tpu.pipeline_mode<synchronous>, transform_indices = @transform_2, window_bounds = array<i64: 1, 128>}, {pipeline_mode = #tpu.pipeline_mode<synchronous>, transform_indices = @transform_3, window_bounds = array<i64: 128, 128>}, {pipeline_mode = #tpu.pipeline_mode<synchronous>, transform_indices = @transform_4, window_bounds = array<i64: 1, 128>}, {pipeline_mode = #tpu.pipeline_mode<synchronous>, transform_indices = @transform_5, window_bounds = array<i64: 128, 128>}, {pipeline_mode = #tpu.pipeline_mode<synchronous>, transform_indices = @transform_6, window_bounds = array<i64: 1, 128>}, {transform_indices = @transform_7, window_bounds = array<i64: 8, 128>}]} {
    %c0 = arith.constant 0 : index
    %c0_0 = arith.constant 0 : index
    %0 = vector.load %arg1[%c0, %c0_0] : memref<8x8xf32, #tpu.memory_space<vmem>>, vector<8x8xf32>
    %c0_1 = arith.constant 0 : index
    %c0_2 = arith.constant 0 : index
    %1 = vector.load %arg2[%c0_1, %c0_2] : memref<8x128xf32, #tpu.memory_space<vmem>>, vector<8x128xf32>
    %cst = arith.constant dense<0.000000e+00> : vector<8x128xf32>
    %2 = tpu.matmul %0, %1, %cst {dimension_numbers = #tpu.dot_dimension_numbers<[1], [0], [0], [1], [0, 0, 1, 1], [], []>} : vector<8x8xf32>, vector<8x128xf32>, vector<8x128xf32> -> vector<8x128xf32>
    %c0_3 = arith.constant 0 : index
    %c0_4 = arith.constant 0 : index
    %3 = vector.load %arg3[%c0_3, %c0_4] : memref<1x128xf32, #tpu.memory_space<vmem>>, vector<1x128xf32>
    %4 = vector.broadcast %3 : vector<1x128xf32> to vector<8x128xf32>
    %5 = arith.addf %2, %4 : vector<8x128xf32>
    %cst_5 = arith.constant 0.000000e+00 : f32
    %6 = vector.broadcast %cst_5 : f32 to vector<8x128xf32>
    %7 = arith.maximumf %5, %6 : vector<8x128xf32>
    %c0_6 = arith.constant 0 : index
    %c0_7 = arith.constant 0 : index
    %8 = vector.load %arg4[%c0_6, %c0_7] : memref<128x128xf32, #tpu.memory_space<vmem>>, vector<128x128xf32>
    %cst_8 = arith.constant dense<0.000000e+00> : vector<8x128xf32>
    %9 = tpu.matmul %7, %8, %cst_8 {dimension_numbers = #tpu.dot_dimension_numbers<[1], [0], [0], [1], [0, 0, 1, 1], [], []>} : vector<8x128xf32>, vector<128x128xf32>, vector<8x128xf32> -> vector<8x128xf32>
    %c0_9 = arith.constant 0 : index
    %c0_10 = arith.constant 0 : index
    %10 = vector.load %arg5[%c0_9, %c0_10] : memref<1x128xf32, #tpu.memory_space<vmem>>, vector<1x128xf32>
    %11 = vector.broadcast %10 : vector<1x128xf32> to vector<8x128xf32>
    %12 = arith.addf %9, %11 : vector<8x128xf32>
    %cst_11 = arith.constant 0.000000e+00 : f32
    %13 = vector.broadcast %cst_11 : f32 to vector<8x128xf32>
    %14 = arith.maximumf %12, %13 : vector<8x128xf32>
    %c0_12 = arith.constant 0 : index
    %c0_13 = arith.constant 0 : index
    %15 = vector.load %arg6[%c0_12, %c0_13] : memref<128x128xf32, #tpu.memory_space<vmem>>, vector<128x128xf32>
    %cst_14 = arith.constant dense<0.000000e+00> : vector<8x128xf32>
    %16 = tpu.matmul %14, %15, %cst_14 {dimension_numbers = #tpu.dot_dimension_numbers<[1], [0], [0], [1], [0, 0, 1, 1], [], []>} : vector<8x128xf32>, vector<128x128xf32>, vector<8x128xf32> -> vector<8x128xf32>
    %c0_15 = arith.constant 0 : index
    %c0_16 = arith.constant 0 : index
    %17 = vector.load %arg7[%c0_15, %c0_16] : memref<1x128xf32, #tpu.memory_space<vmem>>, vector<1x128xf32>
    %18 = vector.broadcast %17 : vector<1x128xf32> to vector<8x128xf32>
    %19 = arith.addf %16, %18 : vector<8x128xf32>
    %20 = math.tanh %19 : vector<8x128xf32>
    %c0_17 = arith.constant 0 : index
    %c0_18 = arith.constant 0 : index
    %21 = vector.load %arg8[%c0_17, %c0_18] : memref<8x128xf32, #tpu.memory_space<vmem>>, vector<8x128xf32>
    tpu.vector_store %arg8[%c0_17, %c0_18], %20 {strides = array<i32>} : memref<8x128xf32, #tpu.memory_space<vmem>>, vector<8x128xf32>,
    return
  }
  func.func @transform_0(%arg0: i32) -> (i32, i32) {
    %c0_i32 = arith.constant 0 : i32
    %c0_i32_0 = arith.constant 0 : i32
    return %arg0, %c0_i32 : i32, i32
  }
  func.func @transform_1(%arg0: i32) -> (i32, i32) {
    %c0_i32 = arith.constant 0 : i32
    %c0_i32_0 = arith.constant 0 : i32
    %c0_i32_1 = arith.constant 0 : i32
    return %c0_i32, %c0_i32_0 : i32, i32
  }
  func.func @transform_2(%arg0: i32) -> (i32, i32) {
    %c0_i32 = arith.constant 0 : i32
    %c0_i32_0 = arith.constant 0 : i32
    %c0_i32_1 = arith.constant 0 : i32
    return %c0_i32, %c0_i32_0 : i32, i32
  }
  func.func @transform_3(%arg0: i32) -> (i32, i32) {
    %c0_i32 = arith.constant 0 : i32
    %c0_i32_0 = arith.constant 0 : i32
    %c0_i32_1 = arith.constant 0 : i32
    return %c0_i32, %c0_i32_0 : i32, i32
  }
  func.func @transform_4(%arg0: i32) -> (i32, i32) {
    %c0_i32 = arith.constant 0 : i32
    %c0_i32_0 = arith.constant 0 : i32
    %c0_i32_1 = arith.constant 0 : i32
    return %c0_i32, %c0_i32_0 : i32, i32
  }
  func.func @transform_5(%arg0: i32) -> (i32, i32) {
    %c0_i32 = arith.constant 0 : i32
    %c0_i32_0 = arith.constant 0 : i32
    %c0_i32_1 = arith.constant 0 : i32
    return %c0_i32, %c0_i32_0 : i32, i32
  }
  func.func @transform_6(%arg0: i32) -> (i32, i32) {
    %c0_i32 = arith.constant 0 : i32
    %c0_i32_0 = arith.constant 0 : i32
    %c0_i32_1 = arith.constant 0 : i32
    return %c0_i32, %c0_i32_0 : i32, i32
  }
  func.func @transform_7(%arg0: i32) -> (i32, i32) {
    %c0_i32 = arith.constant 0 : i32
    %c0_i32_0 = arith.constant 0 : i32
    return %arg0, %c0_i32 : i32, i32
  }
}

</mosaic_0001>

<llo_original>
// kernel: actor_forward.1
$region0: #{actor_forward.1}
  #allocation0 [shape = 'u32[]', space=smem, size = 0x4, offset = 0x4, fixed_abs, tag = 'smem constant byte address 0x4 - core index']
  #allocation1 [shape = 'u32[144,128]{1,0:T(1,128)}', space=vmem, size = 0x12000, scoped, tag = 'internal scratch']
  %s0 = inlined_call_operand.vmem [shape: f32[8,8], index: 0, kind: input, shape index: {}]
  %s1 = inlined_call_operand.vmem [shape: f32[8,128], index: 1, kind: input, shape index: {}]
  %s2 = inlined_call_operand.vmem [shape: f32[1,128], index: 2, kind: input, shape index: {}]
  %s3 = inlined_call_operand.vmem [shape: f32[128,128], index: 3, kind: input, shape index: {}]
  %s4 = inlined_call_operand.vmem [shape: f32[1,128], index: 4, kind: input, shape index: {}]
  %s5 = inlined_call_operand.vmem [shape: f32[128,128], index: 5, kind: input, shape index: {}]
  %s6 = inlined_call_operand.vmem [shape: f32[1,128], index: 6, kind: input, shape index: {}]
  %s7 = inlined_call_operand.vmem [shape: f32[8,128], index: 7, kind: output, shape index: {}]
  %s8 = sld [smem:[#allocation0]]
  $region38: #{actor_forward.1} parent=0
    _
  %s10 = ssub.s32 1, %s8
  %s11 = scalar_select 0, %s10, %s8
  // Predicated region
  $region2: #{actor_forward.1} parent=0 // pred_check
    _
  $region3: #{actor_forward.1} parent=0 // pred_check_branch
    %13 = sbr.rel (0) target = $region5
  $region4: #{actor_forward.1} parent=0 // pred_region
    _
  $region5: #{actor_forward.1} parent=0 // pred_fallthru
    _
  // Predicated region
  $region6: #{actor_forward.1} parent=0 // pred_check
    _
  $region7: #{actor_forward.1} parent=0 // pred_check_branch
    %15 = sbr.rel (0) target = $region9
  $region8: #{actor_forward.1} parent=0 // pred_region
    _
  $region9: #{actor_forward.1} parent=0 // pred_fallthru
    _
  // Predicated region
  $region10: #{actor_forward.1} parent=0 // pred_check
    _
  $region11: #{actor_forward.1} parent=0 // pred_check_branch
    %17 = sbr.rel (0) target = $region13
  $region12: #{actor_forward.1} parent=0 // pred_region
    _
  $region13: #{actor_forward.1} parent=0 // pred_fallthru
    _
  // Predicated region
  $region14: #{actor_forward.1} parent=0 // pred_check
    _
  $region15: #{actor_forward.1} parent=0 // pred_check_branch
    %19 = sbr.rel (0) target = $region17
  $region16: #{actor_forward.1} parent=0 // pred_region
    _
  $region17: #{actor_forward.1} parent=0 // pred_fallthru
    _
  // Predicated region
  $region18: #{actor_forward.1} parent=0 // pred_check
    _
  $region19: #{actor_forward.1} parent=0 // pred_check_branch
    %21 = sbr.rel (0) target = $region21
  $region20: #{actor_forward.1} parent=0 // pred_region
    _
  $region21: #{actor_forward.1} parent=0 // pred_fallthru
    _
  // Predicated region
  $region22: #{actor_forward.1} parent=0 // pred_check
    _
  $region23: #{actor_forward.1} parent=0 // pred_check_branch
    %23 = sbr.rel (0) target = $region25
  $region24: #{actor_forward.1} parent=0 // pred_region
    _
  $region25: #{actor_forward.1} parent=0 // pred_fallthru
    _
  // Predicated region
  $region26: #{actor_forward.1} parent=0 // pred_check
    _
  $region27: #{actor_forward.1} parent=0 // pred_check_branch
    %25 = sbr.rel (0) target = $region29
  $region28: #{actor_forward.1} parent=0 // pred_region
    _
  $region29: #{actor_forward.1} parent=0 // pred_fallthru
    _
  %v26 = vld [vmem:[%s0] sm:$0xff]
  %v27 = vld [vmem:[%s1] sm:$0xff]
  %v28 = vld [vmem:[%s2] sm:$0x1]
  %v30 = vlaneseq
  %v31 = vshrl.u32 %v30, 7
  %v32 = vsub.s32 0, %v31
  %v33 = vrot.slane %v28, %v32
  %vm35 = vcmask 64512
  %v37 = vsel %vm35, %v26, 0
  %39 = vmatprep.subr.mxu0 0.0
  %40 = vmatpush1.msra.mxu0 %v27
  %41 = vmatprep.subr.mxu0 0.0
  %42 = vmatpush1.msra.mxu0 0.0
  %43 = vmatprep.subr.mxu0 0.0
  %44 = vmatpush1.msra.mxu0 0.0
  %45 = vmatprep.subr.mxu0 0.0
  %46 = vmatpush1.msra.mxu0 0.0
  %47 = vmatprep.subr.mxu0 0.0
  %48 = vmatpush1.msra.mxu0 0.0
  %49 = vmatprep.subr.mxu0 0.0
  %50 = vmatpush1.msra.mxu0 0.0
  %51 = vmatprep.subr.mxu0 0.0
  %52 = vmatpush1.msra.mxu0 0.0
  %53 = vmatprep.subr.mxu0 0.0
  %54 = vmatpush1.msra.mxu0 0.0
  %55 = vmatprep.subr.mxu0 0.0
  %56 = vmatpush1.msra.mxu0 0.0
  %57 = vmatprep.subr.mxu0 0.0
  %58 = vmatpush1.msra.mxu0 0.0
  %59 = vmatprep.subr.mxu0 0.0
  %60 = vmatpush1.msra.mxu0 0.0
  %61 = vmatprep.subr.mxu0 0.0
  %62 = vmatpush1.msra.mxu0 0.0
  %63 = vmatprep.subr.mxu0 0.0
  %64 = vmatpush1.msra.mxu0 0.0
  %65 = vmatprep.subr.mxu0 0.0
  %66 = vmatpush1.msra.mxu0 0.0
  %67 = vmatprep.subr.mxu0 0.0
  %68 = vmatpush1.msra.mxu0 0.0
  %69 = vmatprep.subr.mxu0 0.0
  %70 = vmatpush1.msra.mxu0 0.0
  %71 = vmatprep.subr.mxu0 0.0
  %72 = vmatpush1.msra.mxu0 0.0
  %73 = vmatprep.subr.mxu0 0.0
  %74 = vmatpush1.msra.mxu0 0.0
  %75 = vmatprep.subr.mxu0 0.0
  %76 = vmatpush1.msra.mxu0 0.0
  %77 = vmatprep.subr.mxu0 0.0
  %78 = vmatpush1.msra.mxu0 0.0
  %79 = vmatprep.subr.mxu0 0.0
  %80 = vmatpush1.msra.mxu0 0.0
  %81 = vmatprep.subr.mxu0 0.0
  %82 = vmatpush1.msra.mxu0 0.0
  %83 = vmatprep.subr.mxu0 0.0
  %84 = vmatpush1.msra.mxu0 0.0
  %85 = vmatprep.subr.mxu0 0.0
  %86 = vmatpush1.msra.mxu0 0.0
  %87 = vmatprep.subr.mxu0 0.0
  %88 = vmatpush1.msra.mxu0 0.0
  %89 = vmatprep.subr.mxu0 0.0
  %90 = vmatpush1.msra.mxu0 0.0
  %91 = vmatprep.subr.mxu0 0.0
  %92 = vmatpush1.msra.mxu0 0.0
  %93 = vmatprep.subr.mxu0 0.0
  %94 = vmatpush1.msra.mxu0 0.0
  %95 = vmatprep.subr.mxu0 0.0
  %96 = vmatpush1.msra.mxu0 0.0
  %97 = vmatprep.subr.mxu0 0.0
  %98 = vmatpush1.msra.mxu0 0.0
  %99 = vmatprep.subr.mxu0 0.0
  %100 = vmatpush1.msra.mxu0 0.0
  %101 = vmatprep.subr.mxu0 0.0
  %102 = vmatpush1.msra.mxu0 0.0
  %103 = vmatprep.mubr.f32.mxu0 0.0
  %104 = vmatmul.mubr.f32.gmra.mrb[0].mxu0 %v37
  %v105 = vpop.f32.mrb[0].mxu0
  %v106 = vadd.f32 %v33, %v105
  %v107 = vpop.f32.mrb[0].mxu0
  %108 = vdwg.mxu0
  %v109 = vmax.f32 %v106, 0.0
  %v110 = vld [vmem:[%s3] sm:$0xff]
  %v111 = vld [vmem:[%s3 + $0x8] sm:$0xff]
  %v112 = vld [vmem:[%s3 + $0x10] sm:$0xff]
  %v113 = vld [vmem:[%s3 + $0x18] sm:$0xff]
  %v114 = vld [vmem:[%s3 + $0x20] sm:$0xff]
  %v115 = vld [vmem:[%s3 + $0x28] sm:$0xff]
  %v116 = vld [vmem:[%s3 + $0x30] sm:$0xff]
  %v117 = vld [vmem:[%s3 + $0x38] sm:$0xff]
  %v118 = vld [vmem:[%s3 + $0x40] sm:$0xff]
  %v119 = vld [vmem:[%s3 + $0x48] sm:$0xff]
  %v120 = vld [vmem:[%s3 + $0x50] sm:$0xff]
  %v121 = vld [vmem:[%s3 + $0x58] sm:$0xff]
  %v122 = vld [vmem:[%s3 + $0x60] sm:$0xff]
  %v123 = vld [vmem:[%s3 + $0x68] sm:$0xff]
  %v124 = vld [vmem:[%s3 + $0x70] sm:$0xff]
  %v125 = vld [vmem:[%s3 + $0x78] sm:$0xff]
  %v126 = vld [vmem:[%s4] sm:$0x1]
  %v128 = vlaneseq
  %v129 = vshrl.u32 %v128, 7
  %v130 = vsub.s32 0, %v129
  %v131 = vrot.slane %v126, %v130
  %133 = vmatprep.subr.mxu0 0.0
  %134 = vmatpush1.msra.mxu0 %v110
  %135 = vmatprep.subr.mxu0 0.0
  %136 = vmatpush1.msra.mxu0 %v111
  %137 = vmatprep.subr.mxu0 0.0
  %138 = vmatpush1.msra.mxu0 %v112
  %139 = vmatprep.subr.mxu0 0.0
  %140 = vmatpush1.msra.mxu0 %v113
  %141 = vmatprep.subr.mxu0 0.0
  %142 = vmatpush1.msra.mxu0 %v114
  %143 = vmatprep.subr.mxu0 0.0
  %144 = vmatpush1.msra.mxu0 %v115
  %145 = vmatprep.subr.mxu0 0.0
  %146 = vmatpush1.msra.mxu0 %v116
  %147 = vmatprep.subr.mxu0 0.0
  %148 = vmatpush1.msra.mxu0 %v117
  %149 = vmatprep.subr.mxu0 0.0
  %150 = vmatpush1.msra.mxu0 %v118
  %151 = vmatprep.subr.mxu0 0.0
  %152 = vmatpush1.msra.mxu0 %v119
  %153 = vmatprep.subr.mxu0 0.0
  %154 = vmatpush1.msra.mxu0 %v120
  %155 = vmatprep.subr.mxu0 0.0
  %156 = vmatpush1.msra.mxu0 %v121
  %157 = vmatprep.subr.mxu0 0.0
  %158 = vmatpush1.msra.mxu0 %v122
  %159 = vmatprep.subr.mxu0 0.0
  %160 = vmatpush1.msra.mxu0 %v123
  %161 = vmatprep.subr.mxu0 0.0
  %162 = vmatpush1.msra.mxu0 %v124
  %163 = vmatprep.subr.mxu0 0.0
  %164 = vmatpush1.msra.mxu0 %v125
  %165 = vmatprep.subr.mxu0 0.0
  %166 = vmatpush1.msra.mxu0 0.0
  %167 = vmatprep.subr.mxu0 0.0
  %168 = vmatpush1.msra.mxu0 0.0
  %169 = vmatprep.subr.mxu0 0.0
  %170 = vmatpush1.msra.mxu0 0.0
  %171 = vmatprep.subr.mxu0 0.0
  %172 = vmatpush1.msra.mxu0 0.0
  %173 = vmatprep.subr.mxu0 0.0
  %174 = vmatpush1.msra.mxu0 0.0
  %175 = vmatprep.subr.mxu0 0.0
  %176 = vmatpush1.msra.mxu0 0.0
  %177 = vmatprep.subr.mxu0 0.0
  %178 = vmatpush1.msra.mxu0 0.0
  %179 = vmatprep.subr.mxu0 0.0
  %180 = vmatpush1.msra.mxu0 0.0
  %181 = vmatprep.subr.mxu0 0.0
  %182 = vmatpush1.msra.mxu0 0.0
  %183 = vmatprep.subr.mxu0 0.0
  %184 = vmatpush1.msra.mxu0 0.0
  %185 = vmatprep.subr.mxu0 0.0
  %186 = vmatpush1.msra.mxu0 0.0
  %187 = vmatprep.subr.mxu0 0.0
  %188 = vmatpush1.msra.mxu0 0.0
  %189 = vmatprep.subr.mxu0 0.0
  %190 = vmatpush1.msra.mxu0 0.0
  %191 = vmatprep.subr.mxu0 0.0
  %192 = vmatpush1.msra.mxu0 0.0
  %193 = vmatprep.subr.mxu0 0.0
  %194 = vmatpush1.msra.mxu0 0.0
  %195 = vmatprep.subr.mxu0 0.0
  %196 = vmatpush1.msra.mxu0 0.0
  %197 = vmatprep.mubr.f32.mxu0 0.0
  %198 = vmatmul.mubr.f32.gmra.mrb[0].mxu0 %v109
  %v199 = vpop.f32.mrb[0].mxu0
  %v200 = vadd.f32 %v131, %v199
  %v201 = vpop.f32.mrb[0].mxu0
  %202 = vdwg.mxu0
  %v203 = vmax.f32 %v200, 0.0
  %v204 = vld [vmem:[%s5] sm:$0xff]
  %v205 = vld [vmem:[%s5 + $0x8] sm:$0xff]
  %v206 = vld [vmem:[%s5 + $0x10] sm:$0xff]
  %v207 = vld [vmem:[%s5 + $0x18] sm:$0xff]
  %v208 = vld [vmem:[%s5 + $0x20] sm:$0xff]
  %v209 = vld [vmem:[%s5 + $0x28] sm:$0xff]
  %v210 = vld [vmem:[%s5 + $0x30] sm:$0xff]
  %v211 = vld [vmem:[%s5 + $0x38] sm:$0xff]
  %v212 = vld [vmem:[%s5 + $0x40] sm:$0xff]
  %v213 = vld [vmem:[%s5 + $0x48] sm:$0xff]
  %v214 = vld [vmem:[%s5 + $0x50] sm:$0xff]
  %v215 = vld [vmem:[%s5 + $0x58] sm:$0xff]
  %v216 = vld [vmem:[%s5 + $0x60] sm:$0xff]
  %v217 = vld [vmem:[%s5 + $0x68] sm:$0xff]
  %v218 = vld [vmem:[%s5 + $0x70] sm:$0xff]
  %v219 = vld [vmem:[%s5 + $0x78] sm:$0xff]
  %v220 = vld [vmem:[%s6] sm:$0x1]
  %v222 = vlaneseq
  %v223 = vshrl.u32 %v222, 7
  %v224 = vsub.s32 0, %v223
  %v225 = vrot.slane %v220, %v224
  %227 = vmatprep.subr.mxu0 0.0
  %228 = vmatpush1.msra.mxu0 %v204
  %229 = vmatprep.subr.mxu0 0.0
  %230 = vmatpush1.msra.mxu0 %v205
  %231 = vmatprep.subr.mxu0 0.0
  %232 = vmatpush1.msra.mxu0 %v206
  %233 = vmatprep.subr.mxu0 0.0
  %234 = vmatpush1.msra.mxu0 %v207
  %235 = vmatprep.subr.mxu0 0.0
  %236 = vmatpush1.msra.mxu0 %v208
  %237 = vmatprep.subr.mxu0 0.0
  %238 = vmatpush1.msra.mxu0 %v209
  %239 = vmatprep.subr.mxu0 0.0
  %240 = vmatpush1.msra.mxu0 %v210
  %241 = vmatprep.subr.mxu0 0.0
  %242 = vmatpush1.msra.mxu0 %v211
  %243 = vmatprep.subr.mxu0 0.0
  %244 = vmatpush1.msra.mxu0 %v212
  %245 = vmatprep.subr.mxu0 0.0
  %246 = vmatpush1.msra.mxu0 %v213
  %247 = vmatprep.subr.mxu0 0.0
  %248 = vmatpush1.msra.mxu0 %v214
  %249 = vmatprep.subr.mxu0 0.0
  %250 = vmatpush1.msra.mxu0 %v215
  %251 = vmatprep.subr.mxu0 0.0
  %252 = vmatpush1.msra.mxu0 %v216
  %253 = vmatprep.subr.mxu0 0.0
  %254 = vmatpush1.msra.mxu0 %v217
  %255 = vmatprep.subr.mxu0 0.0
  %256 = vmatpush1.msra.mxu0 %v218
  %257 = vmatprep.subr.mxu0 0.0
  %258 = vmatpush1.msra.mxu0 %v219
  %259 = vmatprep.subr.mxu0 0.0
  %260 = vmatpush1.msra.mxu0 0.0
  %261 = vmatprep.subr.mxu0 0.0
  %262 = vmatpush1.msra.mxu0 0.0
  %263 = vmatprep.subr.mxu0 0.0
  %264 = vmatpush1.msra.mxu0 0.0
  %265 = vmatprep.subr.mxu0 0.0
  %266 = vmatpush1.msra.mxu0 0.0
  %267 = vmatprep.subr.mxu0 0.0
  %268 = vmatpush1.msra.mxu0 0.0
  %269 = vmatprep.subr.mxu0 0.0
  %270 = vmatpush1.msra.mxu0 0.0
  %271 = vmatprep.subr.mxu0 0.0
  %272 = vmatpush1.msra.mxu0 0.0
  %273 = vmatprep.subr.mxu0 0.0
  %274 = vmatpush1.msra.mxu0 0.0
  %275 = vmatprep.subr.mxu0 0.0
  %276 = vmatpush1.msra.mxu0 0.0
  %277 = vmatprep.subr.mxu0 0.0
  %278 = vmatpush1.msra.mxu0 0.0
  %279 = vmatprep.subr.mxu0 0.0
  %280 = vmatpush1.msra.mxu0 0.0
  %281 = vmatprep.subr.mxu0 0.0
  %282 = vmatpush1.msra.mxu0 0.0
  %283 = vmatprep.subr.mxu0 0.0
  %284 = vmatpush1.msra.mxu0 0.0
  %285 = vmatprep.subr.mxu0 0.0
  %286 = vmatpush1.msra.mxu0 0.0
  %287 = vmatprep.subr.mxu0 0.0
  %288 = vmatpush1.msra.mxu0 0.0
  %289 = vmatprep.subr.mxu0 0.0
  %290 = vmatpush1.msra.mxu0 0.0
  %291 = vmatprep.mubr.f32.mxu0 0.0
  %292 = vmatmul.mubr.f32.gmra.mrb[0].mxu0 %v203
  %v293 = vpop.f32.mrb[0].mxu0
  %v294 = vadd.f32 %v225, %v293
  %v295 = vpop.f32.mrb[0].mxu0
  %296 = vdwg.mxu0
  %v297 = vtanh.pop %v294
  %298 = vst [vmem:[%s7] sm:$0xff] %v297
  // Predicated region
  $region30: #{actor_forward.1} parent=0 // pred_check
    _
  $region31: #{actor_forward.1} parent=0 // pred_check_branch
    %300 = sbr.rel (0) target = $region33
  $region32: #{actor_forward.1} parent=0 // pred_region
    _
  $region33: #{actor_forward.1} parent=0 // pred_fallthru
    _
  // Predicated region
  $region34: #{actor_forward.1} parent=0 // pred_check
    _
  $region35: #{actor_forward.1} parent=0 // pred_check_branch
    %302 = sbr.rel (0) target = $region37
  $region36: #{actor_forward.1} parent=0 // pred_region
    _
  $region37: #{actor_forward.1} parent=0 // pred_fallthru
    _

</llo_original>
